<compile_context>
chip_gen: v5e
topology: v5e:2x2
jax: 0.10.0
libtpu: 0.0.40
codegen_flags: <defaults>
</compile_context>

<pallas_src>
import functools

import jax
import jax.numpy as jnp
from jax.experimental import pallas as pl
from jax.experimental.pallas import tpu as pltpu

_LANES = 128
_ROW_ALIGN = 32  # multiple of 32 satisfies f32 / bf16 / int8 sublane packing


def _cdiv(a, b):
    return -(-a // b)


def _round_up(a, b):
    return _cdiv(a, b) * b


def _pow_static(x, gamma):
    """x ** gamma for a static python gamma.

    Returns None for gamma == 0 (caller skips the multiply), and uses
    square-and-multiply for small integer gammas (gamma=4 -> 2 VPU muls)
    instead of the exp(gamma*log(x)) EUP lowering.
    """
    gamma = float(gamma)
    if gamma == 0.0:
        return None
    if gamma == 1.0:
        return x
    if gamma.is_integer() and 0.0 < gamma <= 16.0:
        g = int(gamma)
        result = None
        base = x
        while g:
            if g & 1:
                result = base if result is None else result * base
            g >>= 1
            if g:
                base = base * base
        return result
    return jnp.power(x, jnp.float32(gamma))


def _asl_kernel(x_ref, t_ref, out_ref, *, gamma_pos, gamma_neg, clip, eps,
                valid_rows_last, binary_targets):
    x = x_ref[...].astype(jnp.float32)
    t = t_ref[...].astype(jnp.float32)

    # sigmoid + clamp(eps, 1 - eps)
    p = jax.nn.sigmoid(x)
    p = jnp.clip(p, jnp.float32(eps), jnp.float32(1.0 - eps))

    # asymmetric probability shift (applied to p itself, as in the module).
    # Upper clamp of the module's (p - clip).clamp(0, 1) is redundant since
    # p <= 1 - eps, so a single maximum suffices.
    if clip is not None and clip > 0:
        p = jnp.maximum(p - jnp.float32(clip), jnp.float32(0.0))

    w_pos = _pow_static(1.0 - p, gamma_pos)
    w_neg = _pow_static(p, gamma_neg)

    if binary_targets:
        # One EUP log per element instead of two (exact for 0/1 targets).
        t_pos = t > jnp.float32(0.5)
        q = jnp.where(t_pos, p, 1.0 - p)
        ll = jnp.log(q)
        if not (w_pos is None and w_neg is None):
            wp = jnp.float32(1.0) if w_pos is None else w_pos
            wn = jnp.float32(1.0) if w_neg is None else w_neg
            ll = ll * jnp.where(t_pos, wp, wn)
    else:
        ll_pos = t * jnp.log(p)
        if w_pos is not None:
            ll_pos = ll_pos * w_pos
        ll_neg = (1.0 - t) * jnp.log(1.0 - p)
        if w_neg is not None:
            ll_neg = ll_neg * w_neg
        ll = ll_pos + ll_neg  # negated once in the wrapper, not per element

    tile_rows = ll.shape[0]
    if valid_rows_last == tile_rows:
        # No ragged tile anywhere: always the cheap unmasked partial sum.
        out_ref[...] = jnp.sum(ll, axis=0, keepdims=True)
    else:
        is_last = pl.program_id(0) == pl.num_programs(0) - 1

        @pl.when(jnp.logical_not(is_last))
        def _():
            out_ref[...] = jnp.sum(ll, axis=0, keepdims=True)

        @pl.when(is_last)
        def _():
            # Only the last grid step pays for the iota/compare/select mask;
            # out-of-bounds rows of the boundary block are garbage and are
            # selected away here (select, so NaNs cannot propagate).
            rid = jax.lax.broadcasted_iota(jnp.int32, ll.shape, 0)
            masked = jnp.where(rid < valid_rows_last, ll, jnp.float32(0.0))
            out_ref[...] = jnp.sum(masked, axis=0, keepdims=True)


def asymmetric_loss(inputs, targets, *, gamma_pos=0.0, gamma_neg=4.0,
                    clip=0.05, eps=1e-8, binary_targets=False,
                    max_tile_rows=1024, target_grid_steps=8):
    """Mean asymmetric loss over all elements; accepts any input shape/dtype.

    `binary_targets=True` enables the single-log fast path (only valid when
    targets are exactly 0/1, the normal multi-label case).
    """
    assert inputs.shape == targets.shape
    assert inputs.ndim >= 1 and inputs.size > 0

    C = int(inputs.shape[-1])
    # Collapsing leading dims of a contiguous array is metadata-only: no copy.
    x2 = inputs.reshape(-1, C)
    t2 = targets.reshape(-1, C)
    R = int(x2.shape[0])
    total = R * C

    # Adaptive row tile: aim for >= target_grid_steps grid steps (v7x megacore
    # balance + DMA/compute overlap), keep each input block <= ~512 KiB of
    # f32-equivalent VMEM, and keep tile_rows a multiple of 32 for sub-32-bit
    # input dtypes.
    c_pad = _round_up(C, _LANES)
    cap_rows = max(_ROW_ALIGN, (131072 // c_pad) // _ROW_ALIGN * _ROW_ALIGN)
    tile_rows = _round_up(_cdiv(R, int(target_grid_steps)), _ROW_ALIGN)
    tile_rows = max(_ROW_ALIGN, min(tile_rows, cap_rows, int(max_tile_rows)))
    if tile_rows >= R:
        tile_rows = R  # single block == full array; no masking needed at all
    grid = _cdiv(R, tile_rows)
    valid_rows_last = R - (grid - 1) * tile_rows

    kernel = functools.partial(
        _asl_kernel, gamma_pos=gamma_pos, gamma_neg=gamma_neg, clip=clip,
        eps=eps, valid_rows_last=valid_rows_last,
        binary_targets=bool(binary_targets))

    partials = pl.pallas_call(
        kernel,
        out_shape=jax.ShapeDtypeStruct((grid, C), jnp.float32),
        grid_spec=pltpu.PrefetchScalarGridSpec(
            num_scalar_prefetch=0,
            grid=(grid,),
            in_specs=[
                pl.BlockSpec((tile_rows, C), lambda i: (i, 0)),
                pl.BlockSpec((tile_rows, C), lambda i: (i, 0)),
            ],
            out_specs=pl.BlockSpec((1, C), lambda i: (i, 0)),
        ),
        compiler_params=pltpu.CompilerParams(
            dimension_semantics=("parallel",)),
    )(x2, t2)

    # Single negation + mean on the tiny partial-sum array (== loss.mean()).
    return -jnp.sum(partials) / jnp.float32(total)


def asymmetric_loss_ref(inputs, targets, *, gamma_pos=0.0, gamma_neg=4.0,
                        clip=0.05, eps=1e-8):
    """Pure-JAX reference mirroring the PyTorch forward line-by-line."""
    p = jax.nn.sigmoid(inputs.astype(jnp.float32))
    p = jnp.clip(p, eps, 1.0 - eps)
    if clip is not None and clip > 0:
        p = jnp.clip(p - clip, 0.0, 1.0)
    t = targets.astype(jnp.float32)
    loss_pos = t * jnp.log(p) * (1.0 - p) ** gamma_pos
    loss_neg = (1.0 - t) * jnp.log(1.0 - p) * p ** gamma_neg
    return jnp.mean(-loss_pos - loss_neg)


if __name__ == "__main__":
    key = jax.random.PRNGKey(0)
    k1, k2, k3, k4, k5, k6 = jax.random.split(key, 6)

    # Logits kept above logit(clip) ~= -2.94 so the module's own degenerate
    # 0*log(0) case (which NaNs in PyTorch as well) cannot occur.

    # Case 1: ragged C (100) and ragged rows, f32 logits/targets, exact
    # two-log formulation, single (full-array) block.
    N1, C1 = 16, 100
    x1 = jax.random.uniform(k1, (N1, C1), minval=-2.5, maxval=3.0,
                            dtype=jnp.float32)
    t1 = (jax.random.uniform(k2, (N1, C1)) > 0.7).astype(jnp.float32)
    out1 = jax.block_until_ready(asymmetric_loss(x1, t1))
    ref1 = asymmetric_loss_ref(x1, t1)
    assert bool(jnp.isfinite(out1)), out1
    assert jnp.allclose(out1, ref1, rtol=2e-4, atol=1e-5), (out1, ref1)

    # Case 2: bf16 logits + int8 targets (HBM byte reduction), binary-target
    # single-log fast path, 3-step parallel grid with a masked ragged last tile.
    N2, C2 = 80, 96
    x2 = jax.random.uniform(k3, (N2, C2), minval=-2.5,
                            maxval=3.0).astype(jnp.bfloat16)
    t2 = (jax.random.uniform(k4, (N2, C2)) > 0.6).astype(jnp.int8)
    out2 = jax.block_until_ready(asymmetric_loss(x2, t2, binary_targets=True))
    ref2 = asymmetric_loss_ref(x2, t2)
    assert bool(jnp.isfinite(out2)), out2
    assert jnp.allclose(out2, ref2, rtol=2e-4, atol=1e-5), (out2, ref2)

    # Case 3: lane-aligned C (128), rows divide the tile evenly -> fully
    # unmasked static path across a 2-step parallel grid.
    N3, C3 = 64, 128
    x3 = jax.random.uniform(k5, (N3, C3), minval=-2.0, maxval=2.5,
                            dtype=jnp.float32)
    t3 = (jax.random.uniform(k6, (N3, C3)) > 0.5).astype(jnp.float32)
    out3 = jax.block_until_ready(asymmetric_loss(x3, t3))
    ref3 = asymmetric_loss_ref(x3, t3)
    assert bool(jnp.isfinite(out3)), out3
    assert jnp.allclose(out3, ref3, rtol=2e-4, atol=1e-5), (out3, ref3)

    print("KERNEL_OK")
</pallas_src>

<mosaic_0001>
module attributes {stable_mosaic.version = 11 : i64} {
  func.func @_asl_kernel(%arg0: i32, %arg1: memref<16x100xf32, #tpu.memory_space<vmem>>, %arg2: memref<16x100xf32, #tpu.memory_space<vmem>>, %arg3: memref<1x100xf32, #tpu.memory_space<vmem>>) attributes {dimension_semantics = [#tpu.dimension_semantics<parallel>], iteration_bounds = array<i64: 1>, scalar_prefetch = 0 : i64, scratch_operands = 0 : i64, tpu.core_type = #tpu.core_type<tc>, window_params = [{transform_indices = @transform_0, window_bounds = array<i64: 16, 100>}, {transform_indices = @transform_1, window_bounds = array<i64: 16, 100>}, {transform_indices = @transform_2, window_bounds = array<i64: 1, 100>}]} {
    %c0 = arith.constant 0 : index
    %c0_0 = arith.constant 0 : index
    %0 = vector.load %arg1[%c0, %c0_0] : memref<16x100xf32, #tpu.memory_space<vmem>>, vector<16x100xf32>
    %c0_1 = arith.constant 0 : index
    %c0_2 = arith.constant 0 : index
    %1 = vector.load %arg2[%c0_1, %c0_2] : memref<16x100xf32, #tpu.memory_space<vmem>>, vector<16x100xf32>
    %2 = arith.negf %0 : vector<16x100xf32>
    %3 = math.exp %2 : vector<16x100xf32>
    %cst = arith.constant 1.000000e+00 : f32
    %4 = vector.broadcast %cst : f32 to vector<16x100xf32>
    %5 = arith.addf %4, %3 : vector<16x100xf32>
    %6 = arith.divf %4, %5 : vector<16x100xf32>
    %cst_3 = arith.constant 9.99999993E-9 : f32
    %cst_4 = arith.constant 1.000000e+00 : f32
    %7 = vector.broadcast %cst_3 : f32 to vector<16x100xf32>
    %8 = arith.maximumf %7, %6 : vector<16x100xf32>
    %9 = vector.broadcast %cst_4 : f32 to vector<16x100xf32>
    %10 = arith.minimumf %9, %8 : vector<16x100xf32>
    %cst_5 = arith.constant 5.000000e-02 : f32
    %11 = vector.broadcast %cst_5 : f32 to vector<16x100xf32>
    %12 = arith.subf %10, %11 : vector<16x100xf32>
    %cst_6 = arith.constant 0.000000e+00 : f32
    %13 = vector.broadcast %cst_6 : f32 to vector<16x100xf32>
    %14 = arith.maximumf %12, %13 : vector<16x100xf32>
    %15 = arith.mulf %14, %14 : vector<16x100xf32>
    %16 = arith.mulf %15, %15 : vector<16x100xf32>
    %17 = math.log %14 : vector<16x100xf32>
    %18 = arith.mulf %1, %17 : vector<16x100xf32>
    %cst_7 = arith.constant 1.000000e+00 : f32
    %19 = vector.broadcast %cst_7 : f32 to vector<16x100xf32>
    %20 = arith.subf %19, %1 : vector<16x100xf32>
    %cst_8 = arith.constant 1.000000e+00 : f32
    %21 = vector.broadcast %cst_8 : f32 to vector<16x100xf32>
    %22 = arith.subf %21, %14 : vector<16x100xf32>
    %23 = math.log %22 : vector<16x100xf32>
    %24 = arith.mulf %20, %23 : vector<16x100xf32>
    %25 = arith.mulf %24, %16 : vector<16x100xf32>
    %26 = arith.addf %18, %25 : vector<16x100xf32>
    %cst_9 = arith.constant dense<0.000000e+00> : vector<100xf32>
    %27 = vector.multi_reduction <add>, %26, %cst_9 [0] : vector<16x100xf32> to vector<100xf32>
    %28 = vector.shape_cast %27 : vector<100xf32> to vector<1x100xf32>
    %c0_10 = arith.constant 0 : index
    %c0_11 = arith.constant 0 : index
    %29 = vector.load %arg3[%c0_10, %c0_11] : memref<1x100xf32, #tpu.memory_space<vmem>>, vector<1x100xf32>
    tpu.vector_store %arg3[%c0_10, %c0_11], %28 {strides = array<i32>} : memref<1x100xf32, #tpu.memory_space<vmem>>, vector<1x100xf32>,
    return
  }
  func.func @transform_0(%arg0: i32) -> (i32, i32) {
    %c0_i32 = arith.constant 0 : i32
    %c0_i32_0 = arith.constant 0 : i32
    return %arg0, %c0_i32 : i32, i32
  }
  func.func @transform_1(%arg0: i32) -> (i32, i32) {
    %c0_i32 = arith.constant 0 : i32
    %c0_i32_0 = arith.constant 0 : i32
    return %arg0, %c0_i32 : i32, i32
  }
  func.func @transform_2(%arg0: i32) -> (i32, i32) {
    %c0_i32 = arith.constant 0 : i32
    %c0_i32_0 = arith.constant 0 : i32
    return %arg0, %c0_i32 : i32, i32
  }
}

</mosaic_0001>

<llo_original>
// kernel: tpu_custom_call.1
$region0: #{tpu_custom_call.1}
  #allocation0 [shape = 'u32[]', space=smem, size = 0x4, offset = 0x4, fixed_abs, tag = 'smem constant byte address 0x4 - core index']
  #allocation1 [shape = 'u32[72,128]{1,0:T(1,128)}', space=vmem, size = 0x9000, scoped, tag = 'internal scratch']
  %s0 = inlined_call_operand.hbm [shape: f32[16,100], index: 0, kind: input, shape index: {}]
  %s1 = inlined_call_operand.hbm [shape: f32[16,100], index: 1, kind: input, shape index: {}]
  %s2 = inlined_call_operand.hbm [shape: f32[1,100], index: 2, kind: output, shape index: {}]
  %s3 = sld [smem:[#allocation0]]
  $region26: #{tpu_custom_call.1} parent=0
    _
  %s5 = ssub.s32 1, %s3
  %s6 = scalar_select 0, %s5, %s3
  $region1: #{tpu_custom_call.1} parent=0
    #allocation2 [shape = 'u8[8192]{0}', space=vmem, size = 0x2000, scoped, tag = 'input window, operand 0, single buffered']
    #allocation3 [shape = 's32[1]{0}', space=sflag, size = 0x4, scoped, tag = 'scoped memory for tpu_custom_call.1']
    #allocation4 [shape = 's32[1]{0}', space=sflag, size = 0x4, scoped, tag = 'scoped memory for tpu_custom_call.1']
    #allocation5 [shape = 'u8[8192]{0}', space=vmem, size = 0x2000, scoped, tag = 'input window, operand 1, single buffered']
    #allocation6 [shape = 's32[1]{0}', space=sflag, size = 0x4, scoped, tag = 'scoped memory for tpu_custom_call.1']
    #allocation7 [shape = 'u8[512]{0}', space=vmem, size = 0x400, scoped, tag = 'output window, operand 0, single buffered']
    %7 = vsyncpa [#allocation3], 0
    %8 = vsyncpa [#allocation6], 0
    %9 = vsyncpa [#allocation4], 0
    // Predicated region
    $region2: #{tpu_custom_call.1} parent=1 // pred_check
      _
    $region3: #{tpu_custom_call.1} parent=1 // pred_check_branch
      %11 = sbr.rel (0) target = $region5
    $region4: #{tpu_custom_call.1} parent=1 // pred_region
      %13 = vsyncadd [#allocation3], 0
      %s14 = sshll.u32 %s0, 4
      %s15 = int_to_ptr.hbm [resolvable:$true] %s14
      %s16 = sshll.u32 [#allocation2], 4
      %s17 = int_to_ptr.vmem [resolvable:$true] %s16
      %22 = dma.hbm_to_vmem [thread:$0]  %s15, 256, %s17, [#allocation3], 128, 128, 8
    $region5: #{tpu_custom_call.1} parent=1 // pred_fallthru
      _
    // Predicated region
    $region6: #{tpu_custom_call.1} parent=1 // pred_check
      _
    $region7: #{tpu_custom_call.1} parent=1 // pred_check_branch
      %24 = sbr.rel (0) target = $region9
    $region8: #{tpu_custom_call.1} parent=1 // pred_region
      %26 = vsyncadd [#allocation6], 0
      %s27 = sshll.u32 %s1, 4
      %s28 = int_to_ptr.hbm [resolvable:$true] %s27
      %s29 = sshll.u32 [#allocation5], 4
      %s30 = int_to_ptr.vmem [resolvable:$true] %s29
      %35 = dma.hbm_to_vmem [thread:$0]  %s28, 256, %s30, [#allocation6], 128, 128, 8
    $region9: #{tpu_custom_call.1} parent=1 // pred_fallthru
      _
    // Predicated region
    $region10: #{tpu_custom_call.1} parent=1 // pred_check
      _
    $region11: #{tpu_custom_call.1} parent=1 // pred_check_branch
      %37 = sbr.rel (0) target = $region13
    $region12: #{tpu_custom_call.1} parent=1 // pred_region
      %39 = dma.done [#allocation3], 256
    $region13: #{tpu_custom_call.1} parent=1 // pred_fallthru
      _
    // Predicated region
    $region14: #{tpu_custom_call.1} parent=1 // pred_check
      _
    $region15: #{tpu_custom_call.1} parent=1 // pred_check_branch
      %41 = sbr.rel (0) target = $region17
    $region16: #{tpu_custom_call.1} parent=1 // pred_region
      %43 = dma.done [#allocation6], 256
    $region17: #{tpu_custom_call.1} parent=1 // pred_fallthru
      _
    %v44 = vld [vmem:[#allocation2] sm:$0xff]
    %v45 = vld [vmem:[#allocation2 + $0x8] sm:$0xff]
    %v46 = vld [vmem:[#allocation5] sm:$0xff]
    %v47 = vld [vmem:[#allocation5 + $0x8] sm:$0xff]
    %v48 = vxor.u32 %v44, 2147483648
    %v49 = vxor.u32 %v45, 2147483648
    %v50 = vmul.f32 %v48, 1.442695
    %v51 = vpow.pop %v50
    %v52 = vmul.f32 %v49, 1.442695
    %v53 = vpow.pop %v52
    %v54 = vadd.f32 %v51, 1.0
    %v55 = vadd.f32 %v53, 1.0
    %v56 = vrcp.pop %v54
    %v57 = vmul.f32 %v54, %v56
    %v58 = vsub.f32 1.0, %v57
    %v59 = vmul.f32 %v56, %v58
    %v60 = vadd.f32 %v56, %v59
    %vm61 = vweird.f32 %v54
    %vm62 = vweird.f32 %v56
    %vm63 = vmor %vm61, %vm62
    %v64 = vsel %vm63, %v56, %v60
    %v65 = vand.u32 2147483647, %v54
    %vm66 = vcmp.eq.f32.partialorder %v65, 8.507059e+37
    %v67 = vand.u32 %v54, 2147483648
    %v68 = vor.u32 1.1754944e-38, %v67
    %v69 = vsel %vm66, %v68, %v64
    %v70 = vmul.f32 1.0, %v69
    %v71 = vrcp.pop %v55
    %v72 = vmul.f32 %v55, %v71
    %v73 = vsub.f32 1.0, %v72
    %v74 = vmul.f32 %v71, %v73
    %v75 = vadd.f32 %v71, %v74
    %vm76 = vweird.f32 %v55
    %vm77 = vweird.f32 %v71
    %vm78 = vmor %vm76, %vm77
    %v79 = vsel %vm78, %v71, %v75
    %v80 = vand.u32 2147483647, %v55
    %vm81 = vcmp.eq.f32.partialorder %v80, 8.507059e+37
    %v82 = vand.u32 %v55, 2147483648
    %v83 = vor.u32 1.1754944e-38, %v82
    %v84 = vsel %vm81, %v83, %v79
    %v85 = vmul.f32 1.0, %v84
    %v86 = vmax.f32 %v70, 1e-08
    %v87 = vmax.f32 %v85, 1e-08
    %v88 = vmin.f32 %v86, 1.0
    %v89 = vmin.f32 %v87, 1.0
    %v90 = vsub.f32 %v88, 0.05
    %v91 = vsub.f32 %v89, 0.05
    %v92 = vmax.f32 %v90, 0.0
    %v93 = vmax.f32 %v91, 0.0
    %v94 = vmul.f32 %v92, %v92
    %v95 = vmul.f32 %v93, %v93
    %v96 = vmul.f32 %v94, %v94
    %v97 = vmul.f32 %v95, %v95
    %v98 = vlog2.pop %v92
    %v99 = vmul.f32 %v98, 0.6931472
    %v100 = vlog2.pop %v93
    %v101 = vmul.f32 %v100, 0.6931472
    %v102 = vmul.f32 %v46, %v99
    %v103 = vmul.f32 %v47, %v101
    %v104 = vsub.f32 1.0, %v46
    %v105 = vsub.f32 1.0, %v47
    %v106 = vsub.f32 1.0, %v92
    %v107 = vsub.f32 1.0, %v93
    %v108 = vlog2.pop %v106
    %v109 = vmul.f32 %v108, 0.6931472
    %v110 = vlog2.pop %v107
    %v111 = vmul.f32 %v110, 0.6931472
    %v112 = vmul.f32 %v104, %v109
    %v113 = vmul.f32 %v105, %v111
    %v114 = vmul.f32 %v112, %v96
    %v115 = vmul.f32 %v113, %v97
    %v116 = vadd.f32 %v102, %v114
    %v117 = vadd.f32 %v103, %v115
    %vm118 = vcmask 818176
    %v119 = vsel %vm118, %v116, 0.0
    %v120 = vsel %vm118, %v117, 0.0
    %v121 = vadd.f32 %v119, %v120
    %v122 = vrot.slane %v121, 4
    %v123 = vadd.f32 %v121, %v122
    %v124 = vrot.slane %v123, 2
    %v125 = vadd.f32 %v123, %v124
    %v126 = vrot.slane %v125, 1
    %v127 = vadd.f32 %v125, %v126
    %vm128 = vcmask 811008
    %129 = vst.msk [vmem:[#allocation7] sm:$0x1] %vm128, %v127
    // Predicated region
    $region18: #{tpu_custom_call.1} parent=1 // pred_check
      _
    $region19: #{tpu_custom_call.1} parent=1 // pred_check_branch
      %131 = sbr.rel (0) target = $region21
    $region20: #{tpu_custom_call.1} parent=1 // pred_region
      %133 = vsyncadd [#allocation4], 0
      %s135 = sshll.u32 [#allocation7], 4
      %s136 = int_to_ptr.vmem [resolvable:$true] %s135
      %s137 = sshll.u32 %s2, 4
      %s138 = int_to_ptr.hbm [resolvable:$true] %s137
      %140 = dma.vmem_to_hbm [thread:$0]  %s136, 16, %s138, [#allocation4]
    $region21: #{tpu_custom_call.1} parent=1 // pred_fallthru
      _
    // Predicated region
    $region22: #{tpu_custom_call.1} parent=1 // pred_check
      _
    $region23: #{tpu_custom_call.1} parent=1 // pred_check_branch
      %142 = sbr.rel (0) target = $region25
    $region24: #{tpu_custom_call.1} parent=1 // pred_region
      %144 = dma.done [#allocation4], 16
    $region25: #{tpu_custom_call.1} parent=1 // pred_fallthru
      _
    %145 = vsyncpa [#allocation3], 1
    %146 = vsyncpa [#allocation6], 1
    %147 = vsyncpa [#allocation4], 1

</llo_original>
